<compile_context>
chip_gen: v7x
topology: tpu7x:2x2x1
jax: 0.10.0
libtpu: 0.0.40
codegen_flags: <defaults>
</compile_context>

<pallas_src>
import functools

import jax
import jax.numpy as jnp
from jax.experimental import pallas as pl
from jax.experimental.pallas import tpu as pltpu


def _triplet_loss_kernel(*refs, bs, n, has_diag, use_bf16_exp):
    """One grid step = one (tb, tr, n) block of logits (plus, optionally, the
    (tb, tr, tr) diagonal square DMA'd as a second, much smaller block).

    Writes one partial sum (broadcast over an (8,128) tile) of
    sum_i [logsumexp(row_i) - row_i[i]] over the valid rows of the block.
    """
    if has_diag:
        x_ref, d_ref, o_ref = refs
    else:
        x_ref, o_ref = refs
        d_ref = None

    bi = pl.program_id(0)          # batch-block index
    ri = pl.program_id(1)          # row-block index

    tb, tr, _ = x_ref.shape
    rows = jax.lax.broadcasted_iota(jnp.int32, (1, tr, 1), 1)    # local row id
    batc = jax.lax.broadcasted_iota(jnp.int32, (tb, 1, 1), 0)    # local batch id

    # ---- Row-wise numerically stable logsumexp. ----
    # The native-dtype block is read per consumer so no full f32 copy is
    # materialized up front; the row max is exact in the input dtype.
    m = jnp.max(x_ref[...], axis=-1, keepdims=True).astype(jnp.float32)  # (tb,tr,1)
    z = x_ref[...].astype(jnp.float32) - m
    if use_bf16_exp:
        p = jnp.exp(z.astype(jnp.bfloat16)).astype(jnp.float32)
    else:
        p = jnp.exp(z)
    lse = m + jnp.log(jnp.sum(p, axis=-1, keepdims=True))                # (tb,tr,1)

    # ---- Diagonal extraction: target column == global row index. ----
    if has_diag:
        dvals = d_ref[...]          # (tb, tr, tr) square starting at col ri*tr
        tgt = rows                  # diag sits at local col == local row
    else:
        dvals = x_ref[...]          # full-width fallback
        tgt = ri * tr + rows        # diag sits at global col == global row
    cols = jax.lax.broadcasted_iota(jnp.int32, (1, 1, dvals.shape[-1]), 2)
    diag = jnp.sum(jnp.where(cols == tgt, dvals.astype(jnp.float32), 0.0),
                   axis=-1, keepdims=True)                               # (tb,tr,1)

    ce = lse - diag                                                      # per-row CE

    # ---- Mask rows coming from DMA padding (batch or row remainder). ----
    valid = ((bi * tb + batc) < bs) & ((ri * tr + rows) < n)             # (tb,tr,1)
    partial = jnp.sum(jnp.where(valid, ce, jnp.float32(0.0)))

    # Lane-dense partial-sum output tile; wrapper reads [..., 0, 0].
    o_ref[...] = jnp.full(o_ref.shape, partial, dtype=jnp.float32)


def _tpu_budgets():
    """(block_target_bytes, vmem_limit_bytes or None, prefer_diag_block)."""
    kind = ""
    try:
        kind = jax.devices()[0].device_kind.lower()
    except Exception:
        pass
    if "v5" in kind or "v6" in kind:
        # 128 MiB physical VMEM, memory-bound HBM: big blocks, generous limit,
        # avoid the extra diag-block HBM traffic.
        return 14 * 1024 * 1024, 96 * 1024 * 1024, False
    if "v2" in kind or "v3" in kind or "v4" in kind:
        # Older chips: modest blocks, leave the compiler's scoped default.
        return 3 * 1024 * 1024, None, False
    # v7x (64 MiB VMEM, 3.2 TB/s HBM) and unknown: smaller VMEM cap; trading a
    # little DMA for less per-element vector work is worthwhile.
    return 8 * 1024 * 1024, 40 * 1024 * 1024, True


def _choose_tiles(bs, n, itemsize, target_bytes):
    """Pick (tb, tr) so one *padded* input block is ~target_bytes.

    VMEM tiles are (sublane, 128)-padded, so size from the padded footprint
    (lane dim rounded to 128, sublane dim to the dtype packing multiple), not
    the logical bytes.  tr is either the full n or a multiple of 128 (which
    also satisfies the bf16/int8 sublane-packing multiples).
    """
    lane_pad = -(-n // 128) * 128
    sub_mult = max(8, 32 // max(itemsize, 1))        # 8 f32, 16 bf16, 32 int8
    row_pad = -(-n // sub_mult) * sub_mult
    bytes_per_mat = row_pad * lane_pad * itemsize    # padded (n, n) footprint

    if bytes_per_mat <= target_bytes:
        tr = n
        tb = max(1, min(bs, target_bytes // bytes_per_mat))
        # Megacore (2 TCs on v7x): ensure >= 2 grid steps when there is enough
        # work to split; harmless on single-TC v5e/v6e.
        if tb == bs and bs > 1:
            tb = (bs + 1) // 2
        elif bs == 1 and n > 256:
            half = -(-((n + 1) // 2) // 128) * 128
            if half < n:
                tr = half
    else:
        tb = 1
        tr = max(128, (target_bytes // (lane_pad * itemsize)) // 128 * 128)
        if tr >= n:
            tr = n
    return tb, tr


def triplet_loss_pallas(outputs, *, block_batch=None, block_rows=None,
                        diag_block=None, use_bf16_exp=False):
    """outputs: (bs, n, n) logits.  Returns scalar float32 loss: mean CE over
    all rows of all batch elements == triplet_loss(loss_reduction='mean')."""
    bs, n, n2 = outputs.shape
    assert n == n2, "expected square (n_vertices, n_vertices) per batch element"

    itemsize = jnp.dtype(outputs.dtype).itemsize
    target_bytes, vmem_limit, prefer_diag = _tpu_budgets()
    tb, tr = _choose_tiles(bs, n, itemsize, target_bytes)
    if block_batch is not None:
        tb = max(1, min(block_batch, bs))
    if block_rows is not None:
        tr = min(block_rows, n)
    assert tr == n or tr % 128 == 0, \
        "row tile must be the full n or a multiple of 128"

    nb = -(-bs // tb)
    nr = -(-n // tr)

    # Fetch the (tb, tr, tr) diagonal square as its own (small) block so the
    # diag compare/select/reduce runs over tr columns instead of n.  Only
    # worth the extra tr/n HBM traffic when that ratio is small; otherwise
    # fall back to the full-width masked diag.
    if diag_block is None:
        diag_block = prefer_diag and tr * 4 <= n
    has_diag = bool(diag_block) and tr < n and tr % 128 == 0

    kernel = functools.partial(_triplet_loss_kernel, bs=bs, n=n,
                               has_diag=has_diag, use_bf16_exp=use_bf16_exp)

    in_specs = [pl.BlockSpec((tb, tr, n), lambda b, r: (b, r, 0))]
    args = [outputs]
    if has_diag:
        in_specs.append(pl.BlockSpec((tb, tr, tr), lambda b, r: (b, r, r)))
        args.append(outputs)

    cost = pl.CostEstimate(
        flops=6 * bs * n * n,                      # max/sub/sum/select/etc.
        transcendentals=bs * n * n + bs * n,       # exp per element + log per row
        bytes_accessed=bs * n * n * itemsize
        + (bs * n * tr * itemsize if has_diag else 0)
        + nb * nr * 8 * 128 * 4,
    )

    compiler_kwargs = dict(dimension_semantics=("parallel", "parallel"))
    if vmem_limit is not None:
        compiler_kwargs["vmem_limit_bytes"] = vmem_limit

    partials = pl.pallas_call(
        kernel,
        out_shape=jax.ShapeDtypeStruct((nb, nr, 8, 128), jnp.float32),
        grid_spec=pltpu.PrefetchScalarGridSpec(
            num_scalar_prefetch=0,
            grid=(nb, nr),
            in_specs=in_specs,
            out_specs=pl.BlockSpec((1, 1, 8, 128), lambda b, r: (b, r, 0, 0)),
        ),
        compiler_params=pltpu.CompilerParams(**compiler_kwargs),
        cost_estimate=cost,
    )(*args)

    total = jnp.float32(bs * n)                   # sum over batch of n_vertices
    return jnp.sum(partials[:, :, 0, 0]) / total


def _triplet_loss_ref(outputs):
    """Pure-JAX reference matching the PyTorch module (loss_reduction='mean')."""
    x = outputs.astype(jnp.float32)
    lse = jax.scipy.special.logsumexp(x, axis=-1)             # (bs, n)
    diag = jnp.diagonal(x, axis1=-2, axis2=-1)                # (bs, n)
    loss = jnp.sum(lse - diag)                                # sum of per-batch CE sums
    total = x.shape[0] * x.shape[1]                           # sum of n_vertices
    return loss / total


if __name__ == "__main__":
    key = jax.random.PRNGKey(0)
    ks = jax.random.split(key, 5)

    # Case 1: shape implied by the module (bs=2, n_vertices=16), default tiling
    # (megacore split gives grid=(2, 1)).
    x1 = jax.random.normal(ks[0], (2, 16, 16), dtype=jnp.float32)
    got = jax.block_until_ready(triplet_loss_pallas(x1))
    ref = _triplet_loss_ref(x1)
    assert jnp.allclose(got, ref, rtol=1e-4, atol=1e-5), (got, ref)

    # Case 2: batch remainder (3 blocks of 2 over bs=5) -> padded-batch masking.
    x2 = jax.random.normal(ks[1], (5, 20, 20), dtype=jnp.float32)
    got = jax.block_until_ready(triplet_loss_pallas(x2, block_batch=2))
    ref = _triplet_loss_ref(x2)
    assert jnp.allclose(got, ref, rtol=1e-4, atol=1e-5), (got, ref)

    # Case 3: row tiling + separate diagonal-square block path (tr=128 < n=256).
    x3 = jax.random.normal(ks[2], (2, 256, 256), dtype=jnp.float32)
    got = jax.block_until_ready(
        triplet_loss_pallas(x3, block_rows=128, diag_block=True))
    ref = _triplet_loss_ref(x3)
    assert jnp.allclose(got, ref, rtol=1e-4, atol=1e-5), (got, ref)

    # Case 4: row remainder (n=160, tr=128) with the diag-block path ->
    # exercises padded-row masking and a partial diagonal block.
    x4 = jax.random.normal(ks[3], (1, 160, 160), dtype=jnp.float32)
    got = jax.block_until_ready(
        triplet_loss_pallas(x4, block_rows=128, diag_block=True))
    ref = _triplet_loss_ref(x4)
    assert jnp.allclose(got, ref, rtol=1e-4, atol=1e-5), (got, ref)

    # Case 5: bf16 inputs (in-kernel f32 upcast; tr is full-n or a multiple of
    # 128, so bf16 sublane packing is respected).
    x5 = jax.random.normal(ks[4], (2, 16, 16), dtype=jnp.bfloat16)
    got = jax.block_until_ready(triplet_loss_pallas(x5))
    ref = _triplet_loss_ref(x5)
    assert jnp.allclose(got, ref, rtol=1e-4, atol=1e-4), (got, ref)

    print("KERNEL_OK")
</pallas_src>

<mosaic_0001>
module attributes {stable_mosaic.version = 11 : i64} {
  func.func @_triplet_loss_kernel(%arg0: i32, %arg1: i32, %arg2: memref<1x16x16xf32, #tpu.memory_space<vmem>>, %arg3: memref<1x1x8x128xf32, #tpu.memory_space<vmem>>) attributes {dimension_semantics = [#tpu.dimension_semantics<parallel>, #tpu.dimension_semantics<parallel>], iteration_bounds = array<i64: 2, 1>, scalar_prefetch = 0 : i64, scratch_operands = 0 : i64, tpu.core_type = #tpu.core_type<tc>, window_params = [{transform_indices = @transform_0, window_bounds = array<i64: 1, 16, 16>}, {transform_indices = @transform_1, window_bounds = array<i64: 1, 1, 8, 128>}]} {
    %0 = tpu.iota {dimensions = array<i32: 1>} : vector<1x16x1xi32>
    %1 = tpu.iota {dimensions = array<i32: 0>} : vector<1x1x1xi32>
    %c0 = arith.constant 0 : index
    %c0_0 = arith.constant 0 : index
    %c0_1 = arith.constant 0 : index
    %2 = vector.load %arg2[%c0, %c0_0, %c0_1] : memref<1x16x16xf32, #tpu.memory_space<vmem>>, vector<1x16x16xf32>
    %cst = arith.constant dense<0xFF800000> : vector<1x16xf32>
    %3 = vector.multi_reduction <maximumf>, %2, %cst [2] : vector<1x16x16xf32> to vector<1x16xf32>
    %4 = vector.shape_cast %3 : vector<1x16xf32> to vector<1x16x1xf32>
    %c0_2 = arith.constant 0 : index
    %c0_3 = arith.constant 0 : index
    %c0_4 = arith.constant 0 : index
    %5 = vector.load %arg2[%c0_2, %c0_3, %c0_4] : memref<1x16x16xf32, #tpu.memory_space<vmem>>, vector<1x16x16xf32>
    %6 = vector.broadcast %4 : vector<1x16x1xf32> to vector<1x16x16xf32>
    %7 = arith.subf %5, %6 : vector<1x16x16xf32>
    %8 = math.exp %7 : vector<1x16x16xf32>
    %cst_5 = arith.constant dense<0.000000e+00> : vector<1x16xf32>
    %9 = vector.multi_reduction <add>, %8, %cst_5 [2] : vector<1x16x16xf32> to vector<1x16xf32>
    %10 = vector.shape_cast %9 : vector<1x16xf32> to vector<1x16x1xf32>
    %11 = math.log %10 : vector<1x16x1xf32>
    %12 = arith.addf %4, %11 : vector<1x16x1xf32>
    %c0_6 = arith.constant 0 : index
    %c0_7 = arith.constant 0 : index
    %c0_8 = arith.constant 0 : index
    %13 = vector.load %arg2[%c0_6, %c0_7, %c0_8] : memref<1x16x16xf32, #tpu.memory_space<vmem>>, vector<1x16x16xf32>
    %c16_i32 = arith.constant 16 : i32
    %14 = arith.muli %arg1, %c16_i32 : i32
    %15 = vector.broadcast %14 : i32 to vector<1x16x1xi32>
    %16 = arith.addi %15, %0 : vector<1x16x1xi32>
    %17 = tpu.iota {dimensions = array<i32: 2>} : vector<1x1x16xi32>
    %18 = vector.broadcast %17 : vector<1x1x16xi32> to vector<1x16x16xi32>
    %19 = vector.broadcast %16 : vector<1x16x1xi32> to vector<1x16x16xi32>
    %20 = arith.cmpi eq, %18, %19 : vector<1x16x16xi32>
    %cst_9 = arith.constant 0.000000e+00 : f32
    %21 = vector.broadcast %cst_9 : f32 to vector<1x16x16xf32>
    %22 = arith.select %20, %13, %21 : vector<1x16x16xi1>, vector<1x16x16xf32>
    %cst_10 = arith.constant dense<0.000000e+00> : vector<1x16xf32>
    %23 = vector.multi_reduction <add>, %22, %cst_10 [2] : vector<1x16x16xf32> to vector<1x16xf32>
    %24 = vector.shape_cast %23 : vector<1x16xf32> to vector<1x16x1xf32>
    %25 = arith.subf %12, %24 : vector<1x16x1xf32>
    %c1_i32 = arith.constant 1 : i32
    %26 = arith.muli %arg0, %c1_i32 : i32
    %27 = vector.broadcast %26 : i32 to vector<1x1x1xi32>
    %28 = arith.addi %27, %1 : vector<1x1x1xi32>
    %c2_i32 = arith.constant 2 : i32
    %29 = vector.broadcast %c2_i32 : i32 to vector<1x1x1xi32>
    %30 = arith.cmpi slt, %28, %29 : vector<1x1x1xi32>
    %c16_i32_11 = arith.constant 16 : i32
    %31 = arith.muli %arg1, %c16_i32_11 : i32
    %32 = vector.broadcast %31 : i32 to vector<1x16x1xi32>
    %33 = arith.addi %32, %0 : vector<1x16x1xi32>
    %c16_i32_12 = arith.constant 16 : i32
    %34 = vector.broadcast %c16_i32_12 : i32 to vector<1x16x1xi32>
    %35 = arith.cmpi slt, %33, %34 : vector<1x16x1xi32>
    %36 = vector.broadcast %30 : vector<1x1x1xi1> to vector<1x16x1xi1>
    %37 = arith.andi %36, %35 : vector<1x16x1xi1>
    %cst_13 = arith.constant 0.000000e+00 : f32
    %38 = vector.broadcast %cst_13 : f32 to vector<1x16x1xf32>
    %39 = arith.select %37, %25, %38 : vector<1x16x1xi1>, vector<1x16x1xf32>
    %40 = vector.shape_cast %39 : vector<1x16x1xf32> to vector<1x1x16x1xf32>
    %cst_14 = arith.constant dense<0.000000e+00> : vector<1xf32>
    %41 = vector.multi_reduction <add>, %40, %cst_14 [1, 2, 3] : vector<1x1x16x1xf32> to vector<1xf32>
    %42 = vector.shape_cast %41 : vector<1xf32> to vector<1x1x1x1xf32>
    %43 = vector.extract %42[0, 0, 0, 0] : f32 from vector<1x1x1x1xf32>
    %44 = vector.broadcast %43 : f32 to vector<1x1x8x128xf32>
    %c0_15 = arith.constant 0 : index
    %c0_16 = arith.constant 0 : index
    %c0_17 = arith.constant 0 : index
    %c0_18 = arith.constant 0 : index
    %45 = vector.load %arg3[%c0_15, %c0_16, %c0_17, %c0_18] : memref<1x1x8x128xf32, #tpu.memory_space<vmem>>, vector<1x1x8x128xf32>
    tpu.vector_store %arg3[%c0_15, %c0_16, %c0_17, %c0_18], %44 {strides = array<i32>} : memref<1x1x8x128xf32, #tpu.memory_space<vmem>>, vector<1x1x8x128xf32>,
    return
  }
  func.func @transform_0(%arg0: i32, %arg1: i32) -> (i32, i32, i32) {
    %c0_i32 = arith.constant 0 : i32
    %c0_i32_0 = arith.constant 0 : i32
    return %arg0, %arg1, %c0_i32 : i32, i32, i32
  }
  func.func @transform_1(%arg0: i32, %arg1: i32) -> (i32, i32, i32, i32) {
    %c0_i32 = arith.constant 0 : i32
    %c0_i32_0 = arith.constant 0 : i32
    %c0_i32_1 = arith.constant 0 : i32
    return %arg0, %arg1, %c0_i32, %c0_i32_0 : i32, i32, i32, i32
  }
}

</mosaic_0001>

<llo_original>
// kernel: tpu_custom_call.1
$region0: #{tpu_custom_call.1}
  #allocation0 [shape = 'u32[]', space=smem, size = 0x4, offset = 0x4, fixed_abs, tag = 'smem constant byte address 0x4 - core index']
  #allocation1 [shape = 'u32[144,128]{1,0:T(1,128)}', space=vmem, size = 0x12000, scoped, tag = 'internal scratch']
  %s0 = inlined_call_operand.hbm [shape: f32[2,16,16], index: 0, kind: input, shape index: {}]
  %s1 = inlined_call_operand.hbm [shape: f32[2,1,8,128], index: 1, kind: output, shape index: {}]
  %s2 = sld [smem:[#allocation0]]
  $region41: #{tpu_custom_call.1} parent=0
    _
  %s4 = ssub.s32 1, %s2
  %s5 = scalar_select 0, %s4, %s2
  $region1: #{tpu_custom_call.1} parent=0
    #allocation2 [shape = 'u8[16384]{0}', space=vmem, size = 0x4000, scoped, tag = 'input window, operand 0']
    #allocation3 [shape = 's32[2]{0}', space=sflag, size = 0x8, scoped, tag = 'scoped memory for tpu_custom_call.1']
    #allocation4 [shape = 's32[2]{0}', space=sflag, size = 0x8, scoped, tag = 'scoped memory for tpu_custom_call.1']
    #allocation5 [shape = 'u8[8192]{0}', space=vmem, size = 0x2000, scoped, tag = 'output window, operand 0']
    %6 = vsyncpa [#allocation3], 0
    %s7 = scalar_lea.sflag [#allocation3], 1
    %8 = vsyncpa %s7, 0
    %9 = vsyncpa [#allocation4], 0
    %s10 = scalar_lea.sflag [#allocation4], 1
    %11 = vsyncpa %s10, 0
    loop: start=0, step=1, limit=4
    $region2: #{tpu_custom_call.1} parent=1 // loop_pre_header
      _
    $region3: #{tpu_custom_call.1} parent=1 // loop_header
      %s13 = sphi 0, %s17
      %p14 = scmp.ge.s32.totalorder %s13, 4
      %s20 = sphi 0, %s32
      %s21 = sphi 0, %s28
      %s22 = sphi 0, %s20
      %s23 = sphi 0, %s21
      %s24 = sphi 0, %s22
      %s25 = sphi 0, %s23
      %s37 = sphi 0, %s39
      %s40 = sphi 0, %s37
      %s41 = sphi 0, %s40
      %s57 = sphi 0, %s41
      %s65 = sphi 0, %s67
      %s68 = sphi 0, %s65
      %s69 = sphi 0, %s68
      %s85 = sphi 0, %s69
    $region4: #{tpu_custom_call.1} parent=1 // loop_header_branch
      %16 = sbr.rel (%p14) target = $region8
    $region5: #{tpu_custom_call.1} parent=1 // loop_body
      %s18 = ssub.s32 %s13, 1
      %s19 = ssub.s32 %s13, 2
      %s26 = sadd.s32 1, %s21
      %p27 = scmp.ge.s32.totalorder %s26, 1
      %s28 = scalar_select %p27, 0, %s26
      %s29 = sadd.s32 1, %s20
      %s30 = scalar_select %p27, %s29, %s20
      %p31 = scmp.ge.s32.totalorder %s30, 2
      %s32 = scalar_select %p31, 0, %s30
      %s33 = ssub.s32 %s20, %s32
      %s34 = ssub.s32 %s21, %s28
      %s35 = sor.u32 %s33, %s34
      %p36 = scmp.eq.s32.totalorder %s35, 0
      %s38 = sadd.s32 %s37, 1
      %s39 = scalar_select %p36, %s37, %s38
      %p42 = pneg %p36
      %p43 = scmp.eq.s32.totalorder %s13, 1
      %p44 = por %p42, %p43
      %p45 = scmp.ne.s32.totalorder %s37, %s40
      %p46 = scmp.eq.s32.totalorder %s13, 0
      %p47 = por %p45, %p46
      %p48 = scmp.ne.s32.totalorder %s37, %s40
      %p49 = scmp.eq.s32.totalorder %s18, 1
      %p50 = por %p48, %p49
      %p51 = scmp.ne.s32.totalorder %s40, %s41
      %p52 = scmp.eq.s32.totalorder %s18, 0
      %p53 = por %p51, %p52
      %p54 = scmp.ne.s32.totalorder %s40, %s41
      %p55 = scmp.eq.s32.totalorder %s19, 1
      %p56 = por %p54, %p55
      %p58 = scmp.ne.s32.totalorder %s41, %s57
      %p59 = scmp.eq.s32.totalorder %s19, 0
      %p60 = por %p58, %p59
      %s61 = ssub.s32 %s20, %s32
      %s62 = ssub.s32 %s21, %s28
      %s63 = sor.u32 %s61, %s62
      %p64 = scmp.eq.s32.totalorder %s63, 0
      %s66 = sadd.s32 %s65, 1
      %s67 = scalar_select %p64, %s65, %s66
      %p70 = pneg %p64
      %p71 = scmp.eq.s32.totalorder %s13, 1
      %p72 = por %p70, %p71
      %p73 = scmp.ne.s32.totalorder %s65, %s68
      %p74 = scmp.eq.s32.totalorder %s13, 0
      %p75 = por %p73, %p74
      %p76 = scmp.ne.s32.totalorder %s65, %s68
      %p77 = scmp.eq.s32.totalorder %s18, 1
      %p78 = por %p76, %p77
      %p79 = scmp.ne.s32.totalorder %s68, %s69
      %p80 = scmp.eq.s32.totalorder %s18, 0
      %p81 = por %p79, %p80
      %p82 = scmp.ne.s32.totalorder %s68, %s69
      %p83 = scmp.eq.s32.totalorder %s19, 1
      %p84 = por %p82, %p83
      %p86 = scmp.ne.s32.totalorder %s69, %s85
      %p87 = scmp.eq.s32.totalorder %s19, 0
      %p88 = por %p86, %p87
      %p89 = scmp.le.s32.totalorder 1, %s13
      %p90 = scmp.lt.s32.totalorder %s13, 3
      %p91 = pnand %p89, %p90
      %p92 = pneg %p91
      // Predicated region
      $region9: #{tpu_custom_call.1} parent=5 // pred_check
        _
      $region10: #{tpu_custom_call.1} parent=5 // pred_check_branch
        %94 = sbr.rel (%p91) target = $region12
      $region11: #{tpu_custom_call.1} parent=5 // pred_region
        %s95 = ssub.s32 %s13, 1
      $region12: #{tpu_custom_call.1} parent=5 // pred_fallthru
        _
      %p96 = scmp.lt.s32.totalorder %s13, 2
      // Predicated region
      $region13: #{tpu_custom_call.1} parent=5 // pred_check
        %p97 = pneg %p96
      $region14: #{tpu_custom_call.1} parent=5 // pred_check_branch
        %99 = sbr.rel (%p97) target = $region16
      $region15: #{tpu_custom_call.1} parent=5 // pred_region
        // Predicated region
        $region17: #{tpu_custom_call.1} parent=15 // pred_check
          %p100 = pneg %p47
        $region18: #{tpu_custom_call.1} parent=15 // pred_check_branch
          %102 = sbr.rel (%p100) target = $region20
        $region19: #{tpu_custom_call.1} parent=15 // pred_region
          %s103 = sand.u32 %s37, 1
          %s104 = scalar_lea.sflag [#allocation3], %s103
          %s105 = sand.u32 %s37, 1
          %s106 = smul.addr %s105, 16
          %s107 = scalar_lea.vmem [#allocation2], %s106
          %s108 = smul.u32 2, %s21
          %s110 = ssub.s32 256, 256
          %111 = vsyncadd %s104, %s110
          %s112 = smul.addr %s20, 2
          %s113 = sadd.s32 %s108, %s112
          %s114 = smul.addr %s113, 128
          %s115 = scalar_lea.hbm %s0, %s114
          %s116 = sshll.u32 %s107, 4
          %s117 = int_to_ptr.vmem [resolvable:$true] %s116
          %122 = dma.hbm_to_vmem [thread:$0]  %s115, 256, %s117, %s104, 128, 128, 8
        $region20: #{tpu_custom_call.1} parent=15 // pred_fallthru
          _
      $region16: #{tpu_custom_call.1} parent=5 // pred_fallthru
        _
      %p123 = scmp.le.s32.totalorder 1, %s13
      %p124 = scmp.lt.s32.totalorder %s13, 3
      %p125 = pnand %p123, %p124
      %p126 = pneg %p125
      // Predicated region
      $region21: #{tpu_custom_call.1} parent=5 // pred_check
        _
      $region22: #{tpu_custom_call.1} parent=5 // pred_check_branch
        %128 = sbr.rel (%p125) target = $region24
      $region23: #{tpu_custom_call.1} parent=5 // pred_region
        %s129 = ssub.s32 %s13, 1
        %s130 = sand.u32 %s40, 1
        %s131 = scalar_lea.sflag [#allocation3], %s130
        %s132 = sand.u32 %s40, 1
        %s133 = smul.addr %s132, 16
        %s134 = scalar_lea.vmem [#allocation2], %s133
        // Predicated region
        $region25: #{tpu_custom_call.1} parent=23 // pred_check
          %p135 = pneg %p53
        $region26: #{tpu_custom_call.1} parent=23 // pred_check_branch
          %137 = sbr.rel (%p135) target = $region28
        $region27: #{tpu_custom_call.1} parent=23 // pred_region
          %138 = dma.done %s131, 256
        $region28: #{tpu_custom_call.1} parent=23 // pred_fallthru
          _
        %s139 = sand.u32 %s40, 1
        %s140 = scalar_lea.sflag [#allocation3], %s139
        %s141 = sand.u32 %s40, 1
        %s142 = smul.addr %s141, 16
        %s143 = scalar_lea.vmem [#allocation2], %s142
        %p144 = pneg %p53
        %p145 = pneg %p50
        %p146 = pneg %p81
        %p147 = pneg %p78
        %s148 = sand.u32 %s68, 1
        %s149 = scalar_lea.sflag [#allocation4], %s148
        %s150 = sand.u32 %s68, 1
        %s151 = smul.addr %s150, 8
        %s152 = scalar_lea.vmem [#allocation5], %s151
        %s153 = smul.u32 2, %s23
        %v154 = vlaneseq
        %v155 = vshrl.u32 %v154, 7
        %v156 = vadd.s32 %v155, 8
        %v157 = vld [vmem:[%s134] sm:$0xff]
        %v158 = vld [vmem:[%s134 + $0x8] sm:$0xff]
        %vm159 = vcmask 130048
        %v160 = vsel %vm159, %v157, -inf
        %161 = vmax.xlane.f32.xlu0 %v160
        %v162 = vpop.xlane.xlu0 %161
        %v163 = vsel %vm159, %v158, -inf
        %164 = vmax.xlane.f32.xlu0 %v163
        %v165 = vpop.xlane.xlu0 %164
        %v166 = vsub.f32 %v157, %v162
        %v167 = vsub.f32 %v158, %v165
        %v168 = vmul.f32 %v166, 1.442695
        %v169 = vpow.pop %v168
        %v170 = vmul.f32 %v167, 1.442695
        %v171 = vpow.pop %v170
        %v172 = vsel %vm159, %v169, 0.0
        %173 = vadd.xlane.f32.xlu0 %v172
        %v174 = vpop.xlane.xlu0 %173
        %v175 = vsel %vm159, %v171, 0.0
        %176 = vadd.xlane.f32.xlu0 %v175
        %v177 = vpop.xlane.xlu0 %176
        %v178 = vlog2.pop %v174
        %v179 = vmul.f32 %v178, 0.6931472
        %v180 = vlog2.pop %v177
        %v181 = vmul.f32 %v180, 0.6931472
        %v182 = vadd.f32 %v162, %v179
        %v183 = vadd.f32 %v165, %v181
        %s184 = smul.u32 %s23, 16
        %v185 = vstv %s184
        %v186 = vadd.s32 %v185, %v155
        %v187 = vadd.s32 %v185, %v156
        %v188 = vlaneseq
        %v189 = vand.u32 %v188, 127
        %vm190 = vcmp.eq.s32.totalorder %v189, %v186
        %vm191 = vcmp.eq.s32.totalorder %v189, %v187
        %v192 = vsel %vm190, %v157, 0.0
        %v193 = vsel %vm191, %v158, 0.0
        %v194 = vsel %vm159, %v192, 0.0
        %195 = vadd.xlane.f32.xlu0 %v194
        %v196 = vpop.xlane.xlu0 %195
        %v197 = vsel %vm159, %v193, 0.0
        %198 = vadd.xlane.f32.xlu0 %v197
        %v199 = vpop.xlane.xlu0 %198
        %v200 = vsub.f32 %v182, %v196
        %v201 = vsub.f32 %v183, %v199
        %v202 = vstv %s22
        %vm203 = vcmp.lt.s32.totalorder %v202, 2
        %vm204 = vcmp.lt.s32.totalorder %v186, 16
        %vm205 = vcmp.lt.s32.totalorder %v187, 16
        %v206 = vsel %vm203, 1, 0
        %vm207 = vcmp.eq.s32.totalorder %v206, 1
        %vm208 = vmand %vm207, %vm204
        %vm209 = vmand %vm207, %vm205
        %v210 = vsel %vm208, %v200, 0.0
        %v211 = vsel %vm209, %v201, 0.0
        %vm212 = vcmask 7168
        %v213 = vsel %vm212, %v210, 0.0
        %v214 = vsel %vm212, %v211, 0.0
        %v215 = vadd.f32 %v213, %v214
        %216 = vadd.xlane.f32.xlu0 %v215
        %v217 = vpop.xlane.xlu0 %216
        %v218 = vrot.slane %v217, 4
        %v219 = vadd.f32 %v217, %v218
        %v220 = vrot.slane %v219, 2
        %v221 = vadd.f32 %v219, %v220
        %v222 = vrot.slane %v221, 1
        %v223 = vadd.f32 %v221, %v222
        %s224 = vtos %v223
        %v225 = vstv %s224
        %226 = vst [vmem:[%s152] sm:$0xff] %v225
        %s227 = sand.u32 %s68, 1
        %s228 = scalar_lea.sflag [#allocation4], %s227
        %s229 = sand.u32 %s68, 1
        %s230 = smul.addr %s229, 8
        %s231 = scalar_lea.vmem [#allocation5], %s230
        // Predicated region
        $region29: #{tpu_custom_call.1} parent=23 // pred_check
          %p232 = pneg %p78
        $region30: #{tpu_custom_call.1} parent=23 // pred_check_branch
          %234 = sbr.rel (%p232) target = $region32
        $region31: #{tpu_custom_call.1} parent=23 // pred_region
          %s236 = ssub.s32 128, 128
          %237 = vsyncadd %s228, %s236
          %s238 = sadd.s32 %s23, %s22
          %s239 = smul.addr %s238, 128
          %s240 = scalar_lea.hbm %s1, %s239
          %s242 = sshll.u32 %s231, 4
          %s243 = int_to_ptr.vmem [resolvable:$true] %s242
          %245 = dma.vmem_to_hbm [thread:$0]  %s243, 128, %s240, %s228
        $region32: #{tpu_custom_call.1} parent=23 // pred_fallthru
          _
      $region24: #{tpu_custom_call.1} parent=5 // pred_fallthru
        _
      %p246 = scmp.le.s32.totalorder 2, %s13
      // Predicated region
      $region33: #{tpu_custom_call.1} parent=5 // pred_check
        %p247 = pneg %p246
      $region34: #{tpu_custom_call.1} parent=5 // pred_check_branch
        %249 = sbr.rel (%p247) target = $region36
      $region35: #{tpu_custom_call.1} parent=5 // pred_region
        %s250 = ssub.s32 %s13, 2
        // Predicated region
        $region37: #{tpu_custom_call.1} parent=35 // pred_check
          %p251 = pneg %p84
        $region38: #{tpu_custom_call.1} parent=35 // pred_check_branch
          %253 = sbr.rel (%p251) target = $region40
        $region39: #{tpu_custom_call.1} parent=35 // pred_region
          %s254 = sand.u32 %s69, 1
          %s255 = scalar_lea.sflag [#allocation4], %s254
          %s256 = sand.u32 %s69, 1
          %s257 = smul.addr %s256, 8
          %s258 = scalar_lea.vmem [#allocation5], %s257
          %259 = dma.done %s255, 128
        $region40: #{tpu_custom_call.1} parent=35 // pred_fallthru
          _
      $region36: #{tpu_custom_call.1} parent=5 // pred_fallthru
        _
    $region6: #{tpu_custom_call.1} parent=1 // loop_footer
      %s17 = sadd.s32 1, %s13
    $region7: #{tpu_custom_call.1} parent=1 // loop_footer_branch
      %12 = sbr.rel target = $region3
    $region8: #{tpu_custom_call.1} parent=1 // loop_exit
      _
    %260 = vsyncpa [#allocation3], 1
    %s261 = scalar_lea.sflag [#allocation3], 1
    %262 = vsyncpa %s261, 1
    %263 = vsyncpa [#allocation4], 1
    %s264 = scalar_lea.sflag [#allocation4], 1
    %265 = vsyncpa %s264, 1

</llo_original>
